<compile_context>
chip_gen: v7x
topology: tpu7x:2x2x1
jax: 0.10.0
libtpu: 0.0.40
codegen_flags: <defaults>
</compile_context>

<pallas_src>
import jax
import jax.numpy as jnp
from jax import lax
from jax.experimental import pallas as pl
from jax.experimental.pallas import tpu as pltpu


def emission_kernel(x_ref, e_ref, out_ref):
    # x_ref   : (1, CHUNK) int32  -- observation indices for this chunk (padded with 0)
    # e_ref   : (N, M)     f32    -- unnormalized emission matrix (constant block, resident)
    # out_ref : (N, CHUNK) f32    -- lane-dense output slab
    M = e_ref.shape[1]
    chunk = x_ref.shape[1]

    # log_softmax(E, axis=1), recomputed per grid step (no cross-step state, so
    # the grid axis can be "parallel"; at these shapes this is ~2 vregs of work
    # and is hidden under the MXU / output DMA).
    E = e_ref[...]                                                  # (N, M)
    row_max = jnp.max(E, axis=1, keepdims=True)                     # (N, 1)
    shifted = E - row_max                                           # (N, M)
    lse = jnp.log(jnp.sum(jnp.exp(shifted), axis=1, keepdims=True))
    logE = shifted - lse                                            # (N, M)

    # One-hot selection matrix with M on the sublane axis, chunk on lanes.
    # NOTE: the iota is grid-invariant; at large M it could be hoisted into a
    # constant-index resident input, but at small M it is a handful of vreg ops.
    x = x_ref[...]                                                  # (1, CHUNK) int32
    row_ids = lax.broadcasted_iota(jnp.int32, (M, chunk), 0)        # (M, CHUNK)
    onehot = (row_ids == x).astype(jnp.float32)                     # (M, CHUNK)

    # Natural (N, M) @ (M, CHUNK) matmul on the MXU: out[n, j] = logE[n, x[j]].
    # Keep f32 throughout: bf16 would break the 1e-5 tolerance on logE.
    out_ref[...] = jnp.dot(logE, onehot, preferred_element_type=jnp.float32)


def emission_forward_sequence(x_seq, unnormalized_emission_matrix, *, chunk=1024):
    """Batched-over-time forward.

    x_seq: (T, B) int32 observation indices in [0, M).
    Returns (T, B, N) f32, where out[t] == log_softmax(E, 1)[:, x_seq[t]].T
    (the PyTorch module's forward applied independently to each time step).
    """
    T, B = x_seq.shape
    N, M = unnormalized_emission_matrix.shape
    TB = T * B

    # Lane-dense chunking: clamp the (large) default chunk to the padded T*B so
    # tiny inputs do a single grid step without wasted compute.
    tb_128 = ((TB + 127) // 128) * 128
    chunk_eff = max(128, min(chunk, tb_128))
    chunk_eff = ((chunk_eff + 127) // 128) * 128
    TB_pad = ((TB + chunk_eff - 1) // chunk_eff) * chunk_eff

    x_flat = x_seq.reshape(TB).astype(jnp.int32)
    # Pad with index 0 (always valid); padded columns are discarded below.
    x_flat = jnp.pad(x_flat, (0, TB_pad - TB))
    x2d = x_flat.reshape(1, TB_pad)

    e_mat = unnormalized_emission_matrix.astype(jnp.float32)

    out = pl.pallas_call(
        emission_kernel,
        out_shape=jax.ShapeDtypeStruct((N, TB_pad), jnp.float32),
        grid_spec=pltpu.PrefetchScalarGridSpec(
            num_scalar_prefetch=0,
            grid=(TB_pad // chunk_eff,),
            in_specs=[
                pl.BlockSpec((1, chunk_eff), lambda i: (0, i)),   # indices, lane-dense
                pl.BlockSpec((N, M), lambda i: (0, 0)),           # E, constant -> resident
            ],
            out_specs=pl.BlockSpec((N, chunk_eff), lambda i: (0, i)),
        ),
        compiler_params=pltpu.CompilerParams(
            # No cross-step state: safe to shard chunks across TensorCores (v7x).
            dimension_semantics=("parallel",),
            # Explicit scoped-VMEM limit so larger chunk/N/M don't hit the
            # 16 MiB v5e default; 32 MiB is safe on all current chips.
            vmem_limit_bytes=32 * 1024 * 1024,
        ),
    )(x2d, e_mat)

    # out[n, t*B + b] = logE[n, x[t, b]]  ->  (T, B, N).
    # TODO(synk): consumers that accept the lane-dense (N, T*B) slab should use
    # `out[:, :TB]` directly and skip this transpose (saves one HBM round trip).
    return out[:, :TB].reshape(N, T, B).transpose(1, 2, 0)


def emission_forward(x_t, unnormalized_emission_matrix):
    """Single-step forward matching the PyTorch module: x_t (B,) -> (B, N)."""
    return emission_forward_sequence(
        x_t.reshape(1, -1), unnormalized_emission_matrix
    )[0]


if __name__ == "__main__":
    # Small deterministic shapes: N hidden states, M observation symbols,
    # B batch, T time steps.
    N, M, B, T = 8, 16, 8, 16
    key = jax.random.PRNGKey(0)
    k_e, k_x = jax.random.split(key)

    # Parameter init (mirrors torch.randn(N, M)).
    unnormalized_emission_matrix = jax.random.normal(k_e, (N, M), dtype=jnp.float32)
    # Observation indices for a whole sequence: (T, B) in [0, M).
    x_seq = jax.random.randint(k_x, (T, B), 0, M, dtype=jnp.int32)

    # Fused multi-step call (one pallas_call for all T steps; single grid step
    # here since T*B = 128 <= chunk).
    out_seq = emission_forward_sequence(x_seq, unnormalized_emission_matrix)
    out_seq = jax.block_until_ready(out_seq)

    # Same call with a small explicit chunk to exercise the multi-step grid
    # ("parallel" axis, lane-dense 128-wide blocks).
    x_seq2 = jax.random.randint(jax.random.PRNGKey(1), (4 * T, B), 0, M, dtype=jnp.int32)
    out_seq2 = emission_forward_sequence(x_seq2, unnormalized_emission_matrix, chunk=128)
    out_seq2 = jax.block_until_ready(out_seq2)

    # Single-step call (exact module semantics).
    out_step = emission_forward(x_seq[0], unnormalized_emission_matrix)
    out_step = jax.block_until_ready(out_step)

    # Pure-JAX reference of the PyTorch forward.
    logE_ref = jax.nn.log_softmax(unnormalized_emission_matrix, axis=1)   # (N, M)
    ref_seq = logE_ref[:, x_seq].transpose(1, 2, 0)                       # (T, B, N)
    ref_seq2 = logE_ref[:, x_seq2].transpose(1, 2, 0)                     # (4T, B, N)
    ref_step = logE_ref[:, x_seq[0]].T                                    # (B, N)

    assert out_seq.shape == (T, B, N)
    assert out_seq2.shape == (4 * T, B, N)
    assert out_step.shape == (B, N)
    assert jnp.allclose(out_seq, ref_seq, atol=1e-5, rtol=1e-5), "sequence mismatch"
    assert jnp.allclose(out_seq2, ref_seq2, atol=1e-5, rtol=1e-5), "chunked-grid mismatch"
    assert jnp.allclose(out_step, ref_step, atol=1e-5, rtol=1e-5), "single-step mismatch"

    print("KERNEL_OK")
</pallas_src>

<mosaic_0001>
module attributes {stable_mosaic.version = 11 : i64} {
  func.func @emission_kernel(%arg0: i32, %arg1: memref<1x128xi32, #tpu.memory_space<vmem>>, %arg2: memref<8x16xf32, #tpu.memory_space<vmem>>, %arg3: memref<8x128xf32, #tpu.memory_space<vmem>>) attributes {dimension_semantics = [#tpu.dimension_semantics<parallel>], iteration_bounds = array<i64: 1>, scalar_prefetch = 0 : i64, scratch_operands = 0 : i64, tpu.core_type = #tpu.core_type<tc>, window_params = [{transform_indices = @transform_0, window_bounds = array<i64: 1, 128>}, {pipeline_mode = #tpu.pipeline_mode<synchronous>, transform_indices = @transform_1, window_bounds = array<i64: 8, 16>}, {transform_indices = @transform_2, window_bounds = array<i64: 8, 128>}]} {
    %c0 = arith.constant 0 : index
    %c0_0 = arith.constant 0 : index
    %0 = vector.load %arg2[%c0, %c0_0] : memref<8x16xf32, #tpu.memory_space<vmem>>, vector<8x16xf32>
    %cst = arith.constant dense<0xFF800000> : vector<8xf32>
    %1 = vector.multi_reduction <maximumf>, %0, %cst [1] : vector<8x16xf32> to vector<8xf32>
    %2 = vector.shape_cast %1 : vector<8xf32> to vector<8x1xf32>
    %3 = vector.broadcast %2 : vector<8x1xf32> to vector<8x16xf32>
    %4 = arith.subf %0, %3 : vector<8x16xf32>
    %5 = math.exp %4 : vector<8x16xf32>
    %cst_1 = arith.constant dense<0.000000e+00> : vector<8xf32>
    %6 = vector.multi_reduction <add>, %5, %cst_1 [1] : vector<8x16xf32> to vector<8xf32>
    %7 = vector.shape_cast %6 : vector<8xf32> to vector<8x1xf32>
    %8 = math.log %7 : vector<8x1xf32>
    %9 = vector.broadcast %8 : vector<8x1xf32> to vector<8x16xf32>
    %10 = arith.subf %4, %9 : vector<8x16xf32>
    %c0_2 = arith.constant 0 : index
    %c0_3 = arith.constant 0 : index
    %11 = vector.load %arg1[%c0_2, %c0_3] : memref<1x128xi32, #tpu.memory_space<vmem>>, vector<1x128xi32>
    %12 = tpu.iota {dimensions = array<i32: 0>} : vector<16x128xi32>
    %13 = vector.broadcast %11 : vector<1x128xi32> to vector<16x128xi32>
    %14 = arith.cmpi eq, %12, %13 : vector<16x128xi32>
    %15 = arith.extui %14 : vector<16x128xi1> to vector<16x128xi32>
    %16 = arith.sitofp %15 : vector<16x128xi32> to vector<16x128xf32>
    %cst_4 = arith.constant dense<0.000000e+00> : vector<8x128xf32>
    %17 = tpu.matmul %10, %16, %cst_4 {dimension_numbers = #tpu.dot_dimension_numbers<[1], [0], [0], [1], [0, 0, 1, 1], [], []>} : vector<8x16xf32>, vector<16x128xf32>, vector<8x128xf32> -> vector<8x128xf32>
    %c0_5 = arith.constant 0 : index
    %c0_6 = arith.constant 0 : index
    %18 = vector.load %arg3[%c0_5, %c0_6] : memref<8x128xf32, #tpu.memory_space<vmem>>, vector<8x128xf32>
    tpu.vector_store %arg3[%c0_5, %c0_6], %17 {strides = array<i32>} : memref<8x128xf32, #tpu.memory_space<vmem>>, vector<8x128xf32>,
    return
  }
  func.func @transform_0(%arg0: i32) -> (i32, i32) {
    %c0_i32 = arith.constant 0 : i32
    %c0_i32_0 = arith.constant 0 : i32
    return %c0_i32, %arg0 : i32, i32
  }
  func.func @transform_1(%arg0: i32) -> (i32, i32) {
    %c0_i32 = arith.constant 0 : i32
    %c0_i32_0 = arith.constant 0 : i32
    %c0_i32_1 = arith.constant 0 : i32
    return %c0_i32, %c0_i32_0 : i32, i32
  }
  func.func @transform_2(%arg0: i32) -> (i32, i32) {
    %c0_i32 = arith.constant 0 : i32
    %c0_i32_0 = arith.constant 0 : i32
    return %c0_i32, %arg0 : i32, i32
  }
}

</mosaic_0001>

<llo_original>
// kernel: tpu_custom_call.1
$region0: #{tpu_custom_call.1}
  #allocation0 [shape = 'u32[]', space=smem, size = 0x4, offset = 0x4, fixed_abs, tag = 'smem constant byte address 0x4 - core index']
  #allocation1 [shape = 'u32[144,128]{1,0:T(1,128)}', space=vmem, size = 0x12000, scoped, tag = 'internal scratch']
  %s0 = inlined_call_operand.hbm [shape: s32[1,128], index: 0, kind: input, shape index: {}]
  %s1 = inlined_call_operand.hbm [shape: f32[8,16], index: 1, kind: input, shape index: {}]
  %s2 = inlined_call_operand.hbm [shape: f32[8,128], index: 2, kind: output, shape index: {}]
  %s3 = sld [smem:[#allocation0]]
  $region26: #{tpu_custom_call.1} parent=0
    _
  %s5 = ssub.s32 1, %s3
  %s6 = scalar_select 0, %s5, %s3
  $region1: #{tpu_custom_call.1} parent=0
    #allocation2 [shape = 'u8[512]{0}', space=vmem, size = 0x400, scoped, tag = 'input window, operand 0, single buffered']
    #allocation3 [shape = 's32[1]{0}', space=sflag, size = 0x4, scoped, tag = 'scoped memory for tpu_custom_call.1']
    #allocation4 [shape = 's32[1]{0}', space=sflag, size = 0x4, scoped, tag = 'scoped memory for tpu_custom_call.1']
    #allocation5 [shape = 'u8[4096]{0}', space=vmem, size = 0x1000, scoped, tag = 'input window, operand 1, single buffered']
    #allocation6 [shape = 's32[1]{0}', space=sflag, size = 0x4, scoped, tag = 'scoped memory for tpu_custom_call.1']
    #allocation7 [shape = 'u8[4096]{0}', space=vmem, size = 0x1000, scoped, tag = 'output window, operand 0, single buffered']
    %7 = vsyncpa [#allocation3], 0
    %8 = vsyncpa [#allocation6], 0
    %9 = vsyncpa [#allocation4], 0
    // Predicated region
    $region2: #{tpu_custom_call.1} parent=1 // pred_check
      _
    $region3: #{tpu_custom_call.1} parent=1 // pred_check_branch
      %11 = sbr.rel (0) target = $region5
    $region4: #{tpu_custom_call.1} parent=1 // pred_region
      %s13 = ssub.s32 16, 16
      %14 = vsyncadd [#allocation3], %s13
      %s16 = sshll.u32 [#allocation2], 4
      %s17 = int_to_ptr.vmem [resolvable:$true] %s16
      %19 = dma.hbm_to_vmem [thread:$0]  %s0, 16, %s17, [#allocation3]
    $region5: #{tpu_custom_call.1} parent=1 // pred_fallthru
      _
    // Predicated region
    $region6: #{tpu_custom_call.1} parent=1 // pred_check
      _
    $region7: #{tpu_custom_call.1} parent=1 // pred_check_branch
      %21 = sbr.rel (0) target = $region9
    $region8: #{tpu_custom_call.1} parent=1 // pred_region
      %s23 = ssub.s32 128, 128
      %24 = vsyncadd [#allocation6], %s23
      %s26 = sshll.u32 [#allocation5], 4
      %s27 = int_to_ptr.vmem [resolvable:$true] %s26
      %29 = dma.hbm_to_vmem [thread:$0]  %s1, 128, %s27, [#allocation6]
    $region9: #{tpu_custom_call.1} parent=1 // pred_fallthru
      _
    // Predicated region
    $region10: #{tpu_custom_call.1} parent=1 // pred_check
      _
    $region11: #{tpu_custom_call.1} parent=1 // pred_check_branch
      %31 = sbr.rel (0) target = $region13
    $region12: #{tpu_custom_call.1} parent=1 // pred_region
      %32 = dma.done [#allocation3], 16
    $region13: #{tpu_custom_call.1} parent=1 // pred_fallthru
      _
    // Predicated region
    $region14: #{tpu_custom_call.1} parent=1 // pred_check
      _
    $region15: #{tpu_custom_call.1} parent=1 // pred_check_branch
      %34 = sbr.rel (0) target = $region17
    $region16: #{tpu_custom_call.1} parent=1 // pred_region
      %35 = dma.done [#allocation6], 128
    $region17: #{tpu_custom_call.1} parent=1 // pred_fallthru
      _
    %v36 = vld [vmem:[#allocation5] sm:$0xff]
    %vm37 = vcmask 130048
    %v38 = vsel %vm37, %v36, -inf
    %39 = vmax.xlane.f32.xlu0 %v38
    %v40 = vpop.xlane.xlu0 %39
    %v41 = vsub.f32 %v36, %v40
    %v42 = vmul.f32 %v41, 1.442695
    %v43 = vpow.pop %v42
    %v44 = vsel %vm37, %v43, 0.0
    %45 = vadd.xlane.f32.xlu0 %v44
    %v46 = vpop.xlane.xlu0 %45
    %v47 = vlog2.pop %v46
    %v48 = vmul.f32 %v47, 0.6931472
    %v49 = vsub.f32 %v41, %v48
    %v50 = vld [vmem:[#allocation2] sm:$0x1]
    %v51 = vlaneseq
    %v52 = vshrl.u32 %v51, 7
    %v53 = vadd.s32 %v52, 8
    %v54 = vlaneseq
    %v55 = vshrl.u32 %v54, 7
    %v56 = vsub.s32 0, %v55
    %v57 = vrot.slane %v50, %v56
    %vm58 = vcmp.eq.s32.totalorder %v52, %v57
    %vm59 = vcmp.eq.s32.totalorder %v53, %v57
    %v60 = vsel %vm58, 1, 0
    %v61 = vsel %vm59, 1, 0
    %v62 = vcvt.s32.f32 %v60
    %v63 = vcvt.s32.f32 %v61
    %v65 = vsel %vm37, %v49, 0
    %67 = vmatprep.subr.mxu0 0.0
    %68 = vmatpush1.msra.mxu0 %v62
    %69 = vmatprep.subr.mxu0 0.0
    %70 = vmatpush1.msra.mxu0 %v63
    %71 = vmatprep.subr.mxu0 0.0
    %72 = vmatpush1.msra.mxu0 0.0
    %73 = vmatprep.subr.mxu0 0.0
    %74 = vmatpush1.msra.mxu0 0.0
    %75 = vmatprep.subr.mxu0 0.0
    %76 = vmatpush1.msra.mxu0 0.0
    %77 = vmatprep.subr.mxu0 0.0
    %78 = vmatpush1.msra.mxu0 0.0
    %79 = vmatprep.subr.mxu0 0.0
    %80 = vmatpush1.msra.mxu0 0.0
    %81 = vmatprep.subr.mxu0 0.0
    %82 = vmatpush1.msra.mxu0 0.0
    %83 = vmatprep.subr.mxu0 0.0
    %84 = vmatpush1.msra.mxu0 0.0
    %85 = vmatprep.subr.mxu0 0.0
    %86 = vmatpush1.msra.mxu0 0.0
    %87 = vmatprep.subr.mxu0 0.0
    %88 = vmatpush1.msra.mxu0 0.0
    %89 = vmatprep.subr.mxu0 0.0
    %90 = vmatpush1.msra.mxu0 0.0
    %91 = vmatprep.subr.mxu0 0.0
    %92 = vmatpush1.msra.mxu0 0.0
    %93 = vmatprep.subr.mxu0 0.0
    %94 = vmatpush1.msra.mxu0 0.0
    %95 = vmatprep.subr.mxu0 0.0
    %96 = vmatpush1.msra.mxu0 0.0
    %97 = vmatprep.subr.mxu0 0.0
    %98 = vmatpush1.msra.mxu0 0.0
    %99 = vmatprep.subr.mxu0 0.0
    %100 = vmatpush1.msra.mxu0 0.0
    %101 = vmatprep.subr.mxu0 0.0
    %102 = vmatpush1.msra.mxu0 0.0
    %103 = vmatprep.subr.mxu0 0.0
    %104 = vmatpush1.msra.mxu0 0.0
    %105 = vmatprep.subr.mxu0 0.0
    %106 = vmatpush1.msra.mxu0 0.0
    %107 = vmatprep.subr.mxu0 0.0
    %108 = vmatpush1.msra.mxu0 0.0
    %109 = vmatprep.subr.mxu0 0.0
    %110 = vmatpush1.msra.mxu0 0.0
    %111 = vmatprep.subr.mxu0 0.0
    %112 = vmatpush1.msra.mxu0 0.0
    %113 = vmatprep.subr.mxu0 0.0
    %114 = vmatpush1.msra.mxu0 0.0
    %115 = vmatprep.subr.mxu0 0.0
    %116 = vmatpush1.msra.mxu0 0.0
    %117 = vmatprep.subr.mxu0 0.0
    %118 = vmatpush1.msra.mxu0 0.0
    %119 = vmatprep.subr.mxu0 0.0
    %120 = vmatpush1.msra.mxu0 0.0
    %121 = vmatprep.subr.mxu0 0.0
    %122 = vmatpush1.msra.mxu0 0.0
    %123 = vmatprep.subr.mxu0 0.0
    %124 = vmatpush1.msra.mxu0 0.0
    %125 = vmatprep.subr.mxu0 0.0
    %126 = vmatpush1.msra.mxu0 0.0
    %127 = vmatprep.subr.mxu0 0.0
    %128 = vmatpush1.msra.mxu0 0.0
    %129 = vmatprep.subr.mxu0 0.0
    %130 = vmatpush1.msra.mxu0 0.0
    %131 = vmatprep.mubr.f32.mxu0 0.0
    %132 = vmatmul.mubr.f32.gmra.mrb[0].mxu0 %v65
    %v133 = vpop.f32.mrb[0].mxu0
    %v134 = vadd.f32 0.0, %v133
    %v135 = vpop.f32.mrb[0].mxu0
    %136 = vdwg.mxu0
    %137 = vst [vmem:[#allocation7] sm:$0xff] %v134
    // Predicated region
    $region18: #{tpu_custom_call.1} parent=1 // pred_check
      _
    $region19: #{tpu_custom_call.1} parent=1 // pred_check_branch
      %139 = sbr.rel (0) target = $region21
    $region20: #{tpu_custom_call.1} parent=1 // pred_region
      %s141 = ssub.s32 128, 128
      %142 = vsyncadd [#allocation4], %s141
      %s144 = sshll.u32 [#allocation7], 4
      %s145 = int_to_ptr.vmem [resolvable:$true] %s144
      %147 = dma.vmem_to_hbm [thread:$0]  %s145, 128, %s2, [#allocation4]
    $region21: #{tpu_custom_call.1} parent=1 // pred_fallthru
      _
    // Predicated region
    $region22: #{tpu_custom_call.1} parent=1 // pred_check
      _
    $region23: #{tpu_custom_call.1} parent=1 // pred_check_branch
      %149 = sbr.rel (0) target = $region25
    $region24: #{tpu_custom_call.1} parent=1 // pred_region
      %150 = dma.done [#allocation4], 128
    $region25: #{tpu_custom_call.1} parent=1 // pred_fallthru
      _
    %151 = vsyncpa [#allocation3], 1
    %152 = vsyncpa [#allocation6], 1
    %153 = vsyncpa [#allocation4], 1

</llo_original>
